<compile_context>
chip_gen: v7x
topology: tpu7x:2x2x1
jax: 0.10.0
libtpu: 0.0.40
codegen_flags: <defaults>
</compile_context>

<pallas_src>
import functools

import jax
import jax.numpy as jnp
from jax import lax
from jax.experimental import pallas as pl
from jax.experimental.pallas import tpu as pltpu


def _vmem_capacity_bytes():
    try:
        info = pltpu.get_tpu_info()
        cap = int(getattr(info, "vmem_capacity_bytes", 0))
        if cap > 0:
            return cap
    except Exception:
        pass
    return 64 * 1024 * 1024            # conservative fallback (v7x per-core VMEM)


def _auto_tile_n(n, c, itemsize, vmem_cap):
    """Pick tile_n so the true double-buffered working set fits comfortably.

    Per-row VMEM footprint:
      * inputs, double-buffered: logits (c * itemsize) + targets padded to a
        full 128-lane vreg row (128 * 4 B) -- the padding that the previous
        version's "2 MiB logits" accounting missed,
      * ~6 full-tile-sized f32 internal temporaries (x, exp(x-m), one-hot
        select, bool mask, and the lane-padded (tile_n, 1) reduction temps).
    """
    row_inputs = 2 * (c * itemsize + 128 * 4)
    row_temps = 6 * (c * 4 + 128 * 4)
    budget = min(vmem_cap // 2, 64 * 1024 * 1024)
    tile_n = budget // (row_inputs + row_temps)
    # Cap the single logits DMA at ~8 MiB (diminishing returns past 4-8 MiB).
    tile_n = min(tile_n, (8 * 1024 * 1024) // max(1, c * itemsize))
    return max(8, (tile_n // 8) * 8)


def _focal_ce_partial_kernel(x_ref, t_ref, out_ref, *, n_total, tile_n,
                             tiles_per_part, use_mxu_rowsum):
    # x_ref : (tile_n, C) logits (f32 or bf16)  -- VMEM tile
    # t_ref : (tile_n, 1) int32 class ids       -- VMEM tile
    # out   : (1, 1, 1) f32 partial sum of log p[target] for this partition,
    #         resident across the inner grid axis (used as the accumulator).
    p = pl.program_id(0)
    i = pl.program_id(1)

    @pl.when(i == 0)
    def _init():
        out_ref[...] = jnp.zeros(out_ref.shape, out_ref.dtype)

    x = x_ref[...].astype(jnp.float32)                     # (tile_n, C)
    t = t_ref[...]                                         # (tile_n, 1) int32
    tn, c = x.shape

    # Global row ids (UNclamped): rows >= n_total belong to the padded /
    # duplicated tail and must be masked with selects (their HBM contents may
    # be garbage, incl. NaN/Inf -- never turn these selects into multiplies).
    row0 = (p * tiles_per_part + i) * tile_n
    row = lax.broadcasted_iota(jnp.int32, (tn, 1), 0) + row0
    valid = row < n_total                                  # (tile_n, 1) bool

    # Row max stays on the XLU.
    m = jnp.max(x, axis=-1, keepdims=True)                 # (tile_n, 1)
    e = jnp.exp(x - m)                                     # (tile_n, C)
    # TODO(synk): if bf16 logits ever make the f32 EUP exp the binding slot on
    # v6e/v7x, evaluate exp in bf16 and keep the accumulation in f32.

    # Fused one-hot gather of the target logit; the (1, C) lane iota avoids a
    # full (tile_n, C) int32 temp, and row validity is folded into the select.
    col = lax.broadcasted_iota(jnp.int32, (1, c), 1)       # (1, C)
    onehot_x = jnp.where((col == t) & valid, x, 0.0)       # (tile_n, C)

    if use_mxu_rowsum:
        # Both lane-axis sums go through the otherwise idle MXU so the XLU
        # slot does not bind at v7x HBM stream rates. HIGHEST keeps f32 acc.
        ones_c = jnp.ones((c, 1), jnp.float32)
        sum_e = jnp.dot(e, ones_c, precision=lax.Precision.HIGHEST,
                        preferred_element_type=jnp.float32)        # (tile_n, 1)
        gathered = jnp.dot(onehot_x, ones_c, precision=lax.Precision.HIGHEST,
                           preferred_element_type=jnp.float32)     # (tile_n, 1)
    else:
        # Exact XLU reductions (fallback path).
        sum_e = jnp.sum(e, axis=-1, keepdims=True)
        gathered = jnp.sum(onehot_x, axis=-1, keepdims=True)

    lse = jnp.log(sum_e) + m                               # (tile_n, 1)
    picked = jnp.where(valid, gathered - lse, 0.0)         # mask garbage rows
    out_ref[...] += jnp.sum(picked, axis=(0, 1),
                            keepdims=True).reshape(out_ref.shape)
    # TODO(synk): for vocab-sized C (one row >> VMEM) add a class-axis grid
    # with an online (flash-style) logsumexp.


def focal_loss(logits, targets, alpha=0.25, gamma=2.0, tile_n=None):
    """logits: (N, C) float (f32 or bf16); targets: (N,) int class indices.

    Returns the scalar focal loss (float32), matching the PyTorch module with
    logits=False, reduce=True.
    """
    n, c = logits.shape
    itemsize = jnp.dtype(logits.dtype).itemsize
    vmem_cap = _vmem_capacity_bytes()

    if tile_n is None:
        tile_n = _auto_tile_n(n, c, itemsize, vmem_cap)
    if tile_n >= n:
        tile_n = n                           # single full-extent block (legal)
    else:
        tile_n = max(8, (tile_n // 8) * 8)   # keep sublane divisibility

    total_tiles = pl.cdiv(n, tile_n)
    n_parts = 2 if total_tiles >= 2 else 1   # one partial sum per TensorCore
    tiles_per_part = pl.cdiv(total_tiles, n_parts)

    t2 = targets.astype(jnp.int32).reshape(n, 1)

    def in_idx(p, i):
        # Clamp so a duplicated tail grid step never starts a DMA window past
        # the array; its rows compute as >= n in-kernel and are masked to 0.
        return (jnp.minimum(p * tiles_per_part + i, total_tiles - 1), 0)

    cost = pl.CostEstimate(
        flops=10 * n * c,
        transcendentals=n * c,
        bytes_accessed=n * c * itemsize + n * 4 + n_parts * 4,
    )
    # Explicit scoped-VMEM limit (instead of the 16/32 MiB defaults), with
    # headroom below physical VMEM on every generation (128/128/64 MiB).
    vmem_limit = int(min(96 * 1024 * 1024,
                         max(32 * 1024 * 1024, (vmem_cap * 3) // 4)))

    def run(use_mxu_rowsum):
        kern = functools.partial(
            _focal_ce_partial_kernel, n_total=n, tile_n=tile_n,
            tiles_per_part=tiles_per_part, use_mxu_rowsum=use_mxu_rowsum)
        return pl.pallas_call(
            kern,
            out_shape=jax.ShapeDtypeStruct((n_parts, 1, 1), jnp.float32),
            grid_spec=pltpu.PrefetchScalarGridSpec(
                num_scalar_prefetch=0,
                grid=(n_parts, tiles_per_part),
                in_specs=[
                    # TODO(synk): pipeline_mode=pl.Buffered(3) if xprof shows
                    # inter-step DMA gaps and VMEM headroom allows.
                    pl.BlockSpec((tile_n, c), in_idx),
                    # TODO(synk): int16 class ids would halve this block's
                    # 128-lane padding; int32 kept for generality.
                    pl.BlockSpec((tile_n, 1), in_idx),
                ],
                out_specs=pl.BlockSpec((1, 1, 1), lambda p, i: (p, 0, 0)),
            ),
            compiler_params=pltpu.CompilerParams(
                dimension_semantics=("parallel", "arbitrary"),
                vmem_limit_bytes=vmem_limit),
            cost_estimate=cost,
        )(logits, t2)

    try:
        partials = run(True)
    except Exception:
        # Narrow-N f32 MXU matmul (or HIGHEST precision) not supported by this
        # Mosaic build: fall back to exact XLU reductions (identical math).
        partials = run(False)

    # Scalar finalize (once, over the full batch -- matches the PyTorch module).
    sum_logp = jnp.sum(partials)
    ce = -sum_logp / jnp.float32(n)
    pt = jnp.exp(-ce)
    one_minus_pt = jnp.maximum(1.0 - pt, 0.0)   # guard pow of a tiny negative
    return jnp.float32(alpha) * one_minus_pt ** jnp.float32(gamma) * ce


def _reference_focal_loss(logits, targets, alpha=0.25, gamma=2.0):
    logp = jax.nn.log_softmax(logits.astype(jnp.float32), axis=-1)
    ce = -jnp.mean(jnp.take_along_axis(
        logp, targets[:, None].astype(jnp.int32), axis=-1))
    pt = jnp.exp(-ce)
    return alpha * (1.0 - pt) ** gamma * ce


if __name__ == "__main__":
    key = jax.random.PRNGKey(0)
    k1, k2, k3, k4, k5, k6 = jax.random.split(key, 6)

    # Small case consistent with the module: batch of 8 rows, 128 classes
    # (single full-extent block, single partition).
    N, C = 8, 128
    logits = jax.random.normal(k1, (N, C), dtype=jnp.float32)
    targets = jax.random.randint(k2, (N,), 0, C, dtype=jnp.int32)
    loss = jax.block_until_ready(focal_loss(logits, targets, alpha=0.25, gamma=2.0))
    ref = _reference_focal_loss(logits, targets, alpha=0.25, gamma=2.0)
    assert jnp.allclose(loss, ref, rtol=1e-4, atol=1e-5), (loss, ref)

    # Tiled path: 1000 rows, tile 112 -> 9 tiles split across 2 partitions,
    # exercising the clamped duplicate tail step and the masked partial tile.
    N2, C2 = 1000, 128
    logits2 = jax.random.normal(k3, (N2, C2), dtype=jnp.float32)
    targets2 = jax.random.randint(k4, (N2,), 0, C2, dtype=jnp.int32)
    loss2 = jax.block_until_ready(
        focal_loss(logits2, targets2, alpha=0.25, gamma=2.0, tile_n=112))
    ref2 = _reference_focal_loss(logits2, targets2, alpha=0.25, gamma=2.0)
    assert jnp.allclose(loss2, ref2, rtol=1e-4, atol=1e-5), (loss2, ref2)

    # bf16 logits stream straight into the kernel (upcast in-register).
    logits3 = jax.random.normal(k5, (N2, C2), dtype=jnp.float32).astype(jnp.bfloat16)
    targets3 = jax.random.randint(k6, (N2,), 0, C2, dtype=jnp.int32)
    loss3 = jax.block_until_ready(
        focal_loss(logits3, targets3, alpha=0.25, gamma=2.0, tile_n=128))
    ref3 = _reference_focal_loss(logits3, targets3, alpha=0.25, gamma=2.0)
    assert jnp.allclose(loss3, ref3, rtol=5e-3, atol=5e-4), (loss3, ref3)

    print("KERNEL_OK")
</pallas_src>

<mosaic_0001>
module attributes {stable_mosaic.version = 11 : i64} {
  func.func @_focal_ce_partial_kernel(%arg0: i32, %arg1: i32, %arg2: memref<8x128xf32, #tpu.memory_space<vmem>>, %arg3: memref<8x1xi32, #tpu.memory_space<vmem>>, %arg4: memref<1x1x1xf32, #tpu.memory_space<vmem>>) attributes {dimension_semantics = [#tpu.dimension_semantics<parallel>, #tpu.dimension_semantics<arbitrary>], iteration_bounds = array<i64: 1, 1>, scalar_prefetch = 0 : i64, scratch_operands = 0 : i64, tpu.core_type = #tpu.core_type<tc>, window_params = [{transform_indices = @transform_0, window_bounds = array<i64: 8, 128>}, {transform_indices = @transform_1, window_bounds = array<i64: 8, 1>}, {transform_indices = @transform_2, window_bounds = array<i64: 1, 1, 1>}]} {
    %c0_i32 = arith.constant 0 : i32
    %0 = arith.cmpi eq, %arg1, %c0_i32 : i32
    %1 = arith.extui %0 : i1 to i32
    %c0_i32_0 = arith.constant 0 : i32
    %2 = arith.cmpi ne, %1, %c0_i32_0 : i32
    scf.if %2 {
      %cst_17 = arith.constant 0.000000e+00 : f32
      %43 = vector.broadcast %cst_17 : f32 to vector<1x1x1xf32>
      %c0_18 = arith.constant 0 : index
      %c0_19 = arith.constant 0 : index
      %c0_20 = arith.constant 0 : index
      %44 = vector.load %arg4[%c0_18, %c0_19, %c0_20] : memref<1x1x1xf32, #tpu.memory_space<vmem>>, vector<1x1x1xf32>
      tpu.vector_store %arg4[%c0_18, %c0_19, %c0_20], %43 {strides = array<i32>} : memref<1x1x1xf32, #tpu.memory_space<vmem>>, vector<1x1x1xf32>,
    } else {
    }
    %c0 = arith.constant 0 : index
    %c0_1 = arith.constant 0 : index
    %3 = vector.load %arg2[%c0, %c0_1] : memref<8x128xf32, #tpu.memory_space<vmem>>, vector<8x128xf32>
    %c0_2 = arith.constant 0 : index
    %c0_3 = arith.constant 0 : index
    %4 = vector.load %arg3[%c0_2, %c0_3] : memref<8x1xi32, #tpu.memory_space<vmem>>, vector<8x1xi32>
    %c1_i32 = arith.constant 1 : i32
    %5 = arith.muli %arg0, %c1_i32 : i32
    %6 = arith.addi %5, %arg1 : i32
    %c8_i32 = arith.constant 8 : i32
    %7 = arith.muli %6, %c8_i32 : i32
    %8 = tpu.iota {dimensions = array<i32: 0>} : vector<8x1xi32>
    %9 = vector.broadcast %7 : i32 to vector<8x1xi32>
    %10 = arith.addi %8, %9 : vector<8x1xi32>
    %c8_i32_4 = arith.constant 8 : i32
    %11 = vector.broadcast %c8_i32_4 : i32 to vector<8x1xi32>
    %12 = arith.cmpi slt, %10, %11 : vector<8x1xi32>
    %cst = arith.constant dense<0xFF800000> : vector<8xf32>
    %13 = vector.multi_reduction <maximumf>, %3, %cst [1] : vector<8x128xf32> to vector<8xf32>
    %14 = vector.shape_cast %13 : vector<8xf32> to vector<8x1xf32>
    %15 = vector.broadcast %14 : vector<8x1xf32> to vector<8x128xf32>
    %16 = arith.subf %3, %15 : vector<8x128xf32>
    %17 = math.exp %16 : vector<8x128xf32>
    %18 = tpu.iota {dimensions = array<i32: 1>} : vector<1x128xi32>
    %19 = vector.broadcast %18 : vector<1x128xi32> to vector<8x128xi32>
    %20 = vector.broadcast %4 : vector<8x1xi32> to vector<8x128xi32>
    %21 = arith.cmpi eq, %19, %20 : vector<8x128xi32>
    %22 = vector.broadcast %12 : vector<8x1xi1> to vector<8x128xi1>
    %23 = arith.andi %21, %22 : vector<8x128xi1>
    %cst_5 = arith.constant 0.000000e+00 : f32
    %24 = vector.broadcast %cst_5 : f32 to vector<8x128xf32>
    %25 = arith.select %23, %3, %24 : vector<8x128xi1>, vector<8x128xf32>
    %cst_6 = arith.constant 1.000000e+00 : f32
    %26 = vector.broadcast %cst_6 : f32 to vector<128x1xf32>
    %cst_7 = arith.constant dense<0.000000e+00> : vector<8x1xf32>
    %27 = tpu.matmul %17, %26, %cst_7 {dimension_numbers = #tpu.dot_dimension_numbers<[1], [0], [0], [1], [0, 0, 1, 1], [], []>, precision = #tpu.contract_precision<fp32>} : vector<8x128xf32>, vector<128x1xf32>, vector<8x1xf32> -> vector<8x1xf32>
    %cst_8 = arith.constant dense<0.000000e+00> : vector<8x1xf32>
    %28 = tpu.matmul %25, %26, %cst_8 {dimension_numbers = #tpu.dot_dimension_numbers<[1], [0], [0], [1], [0, 0, 1, 1], [], []>, precision = #tpu.contract_precision<fp32>} : vector<8x128xf32>, vector<128x1xf32>, vector<8x1xf32> -> vector<8x1xf32>
    %29 = math.log %27 : vector<8x1xf32>
    %30 = arith.addf %29, %14 : vector<8x1xf32>
    %31 = arith.subf %28, %30 : vector<8x1xf32>
    %cst_9 = arith.constant 0.000000e+00 : f32
    %32 = vector.broadcast %cst_9 : f32 to vector<8x1xf32>
    %33 = arith.select %12, %31, %32 : vector<8x1xi1>, vector<8x1xf32>
    %c0_10 = arith.constant 0 : index
    %c0_11 = arith.constant 0 : index
    %c0_12 = arith.constant 0 : index
    %34 = vector.load %arg4[%c0_10, %c0_11, %c0_12] : memref<1x1x1xf32, #tpu.memory_space<vmem>>, vector<1x1x1xf32>
    %35 = vector.shape_cast %33 : vector<8x1xf32> to vector<1x8x1xf32>
    %cst_13 = arith.constant dense<0.000000e+00> : vector<1xf32>
    %36 = vector.multi_reduction <add>, %35, %cst_13 [1, 2] : vector<1x8x1xf32> to vector<1xf32>
    %37 = vector.shape_cast %36 : vector<1xf32> to vector<1x1x1xf32>
    %38 = vector.extract %37[0, 0, 0] : f32 from vector<1x1x1xf32>
    %39 = vector.broadcast %38 : f32 to vector<1x1xf32>
    %40 = vector.shape_cast %39 : vector<1x1xf32> to vector<1x1x1xf32>
    %41 = arith.addf %34, %40 : vector<1x1x1xf32>
    %c0_14 = arith.constant 0 : index
    %c0_15 = arith.constant 0 : index
    %c0_16 = arith.constant 0 : index
    %42 = vector.load %arg4[%c0_14, %c0_15, %c0_16] : memref<1x1x1xf32, #tpu.memory_space<vmem>>, vector<1x1x1xf32>
    tpu.vector_store %arg4[%c0_14, %c0_15, %c0_16], %41 {strides = array<i32>} : memref<1x1x1xf32, #tpu.memory_space<vmem>>, vector<1x1x1xf32>,
    return
  }
  func.func @transform_0(%arg0: i32, %arg1: i32) -> (i32, i32) {
    %c1_i32 = arith.constant 1 : i32
    %0 = arith.muli %arg0, %c1_i32 : i32
    %1 = arith.addi %0, %arg1 : i32
    %c0_i32 = arith.constant 0 : i32
    %2 = arith.minsi %1, %c0_i32 : i32
    %c0_i32_0 = arith.constant 0 : i32
    %c0_i32_1 = arith.constant 0 : i32
    return %2, %c0_i32_0 : i32, i32
  }
  func.func @transform_1(%arg0: i32, %arg1: i32) -> (i32, i32) {
    %c1_i32 = arith.constant 1 : i32
    %0 = arith.muli %arg0, %c1_i32 : i32
    %1 = arith.addi %0, %arg1 : i32
    %c0_i32 = arith.constant 0 : i32
    %2 = arith.minsi %1, %c0_i32 : i32
    %c0_i32_0 = arith.constant 0 : i32
    %c0_i32_1 = arith.constant 0 : i32
    return %2, %c0_i32_0 : i32, i32
  }
  func.func @transform_2(%arg0: i32, %arg1: i32) -> (i32, i32, i32) {
    %c0_i32 = arith.constant 0 : i32
    %c0_i32_0 = arith.constant 0 : i32
    %c0_i32_1 = arith.constant 0 : i32
    return %arg0, %c0_i32, %c0_i32_0 : i32, i32, i32
  }
}

module attributes {stable_mosaic.version = 11 : i64} {
  func.func @_focal_ce_partial_kernel(%arg0: i32, %arg1: i32, %arg2: memref<8x128xf32, #tpu.memory_space<vmem>>, %arg3: memref<8x1xi32, #tpu.memory_space<vmem>>, %arg4: memref<1x1x1xf32, #tpu.memory_space<vmem>>) attributes {dimension_semantics = [#tpu.dimension_semantics<parallel>, #tpu.dimension_semantics<arbitrary>], iteration_bounds = array<i64: 1, 1>, scalar_prefetch = 0 : i64, scratch_operands = 0 : i64, tpu.core_type = #tpu.core_type<tc>, window_params = [{transform_indices = @transform_0, window_bounds = array<i64: 8, 128>}, {transform_indices = @transform_1, window_bounds = array<i64: 8, 1>}, {transform_indices = @transform_2, window_bounds = array<i64: 1, 1, 1>}]} {
    %c0_i32 = arith.constant 0 : i32
    %0 = arith.cmpi eq, %arg1, %c0_i32 : i32
    %1 = arith.extui %0 : i1 to i32
    %c0_i32_0 = arith.constant 0 : i32
    %2 = arith.cmpi ne, %1, %c0_i32_0 : i32
    scf.if %2 {
      %cst_16 = arith.constant 0.000000e+00 : f32
      %44 = vector.broadcast %cst_16 : f32 to vector<1x1x1xf32>
      %c0_17 = arith.constant 0 : index
      %c0_18 = arith.constant 0 : index
      %c0_19 = arith.constant 0 : index
      %45 = vector.load %arg4[%c0_17, %c0_18, %c0_19] : memref<1x1x1xf32, #tpu.memory_space<vmem>>, vector<1x1x1xf32>
      tpu.vector_store %arg4[%c0_17, %c0_18, %c0_19], %44 {strides = array<i32>} : memref<1x1x1xf32, #tpu.memory_space<vmem>>, vector<1x1x1xf32>,
    } else {
    }
    %c0 = arith.constant 0 : index
    %c0_1 = arith.constant 0 : index
    %3 = vector.load %arg2[%c0, %c0_1] : memref<8x128xf32, #tpu.memory_space<vmem>>, vector<8x128xf32>
    %c0_2 = arith.constant 0 : index
    %c0_3 = arith.constant 0 : index
    %4 = vector.load %arg3[%c0_2, %c0_3] : memref<8x1xi32, #tpu.memory_space<vmem>>, vector<8x1xi32>
    %c1_i32 = arith.constant 1 : i32
    %5 = arith.muli %arg0, %c1_i32 : i32
    %6 = arith.addi %5, %arg1 : i32
    %c8_i32 = arith.constant 8 : i32
    %7 = arith.muli %6, %c8_i32 : i32
    %8 = tpu.iota {dimensions = array<i32: 0>} : vector<8x1xi32>
    %9 = vector.broadcast %7 : i32 to vector<8x1xi32>
    %10 = arith.addi %8, %9 : vector<8x1xi32>
    %c8_i32_4 = arith.constant 8 : i32
    %11 = vector.broadcast %c8_i32_4 : i32 to vector<8x1xi32>
    %12 = arith.cmpi slt, %10, %11 : vector<8x1xi32>
    %cst = arith.constant dense<0xFF800000> : vector<8xf32>
    %13 = vector.multi_reduction <maximumf>, %3, %cst [1] : vector<8x128xf32> to vector<8xf32>
    %14 = vector.shape_cast %13 : vector<8xf32> to vector<8x1xf32>
    %15 = vector.broadcast %14 : vector<8x1xf32> to vector<8x128xf32>
    %16 = arith.subf %3, %15 : vector<8x128xf32>
    %17 = math.exp %16 : vector<8x128xf32>
    %18 = tpu.iota {dimensions = array<i32: 1>} : vector<1x128xi32>
    %19 = vector.broadcast %18 : vector<1x128xi32> to vector<8x128xi32>
    %20 = vector.broadcast %4 : vector<8x1xi32> to vector<8x128xi32>
    %21 = arith.cmpi eq, %19, %20 : vector<8x128xi32>
    %22 = vector.broadcast %12 : vector<8x1xi1> to vector<8x128xi1>
    %23 = arith.andi %21, %22 : vector<8x128xi1>
    %cst_5 = arith.constant 0.000000e+00 : f32
    %24 = vector.broadcast %cst_5 : f32 to vector<8x128xf32>
    %25 = arith.select %23, %3, %24 : vector<8x128xi1>, vector<8x128xf32>
    %cst_6 = arith.constant dense<0.000000e+00> : vector<8xf32>
    %26 = vector.multi_reduction <add>, %17, %cst_6 [1] : vector<8x128xf32> to vector<8xf32>
    %27 = vector.shape_cast %26 : vector<8xf32> to vector<8x1xf32>
    %cst_7 = arith.constant dense<0.000000e+00> : vector<8xf32>
    %28 = vector.multi_reduction <add>, %25, %cst_7 [1] : vector<8x128xf32> to vector<8xf32>
    %29 = vector.shape_cast %28 : vector<8xf32> to vector<8x1xf32>
    %30 = math.log %27 : vector<8x1xf32>
    %31 = arith.addf %30, %14 : vector<8x1xf32>
    %32 = arith.subf %29, %31 : vector<8x1xf32>
    %cst_8 = arith.constant 0.000000e+00 : f32
    %33 = vector.broadcast %cst_8 : f32 to vector<8x1xf32>
    %34 = arith.select %12, %32, %33 : vector<8x1xi1>, vector<8x1xf32>
    %c0_9 = arith.constant 0 : index
    %c0_10 = arith.constant 0 : index
    %c0_11 = arith.constant 0 : index
    %35 = vector.load %arg4[%c0_9, %c0_10, %c0_11] : memref<1x1x1xf32, #tpu.memory_space<vmem>>, vector<1x1x1xf32>
    %36 = vector.shape_cast %34 : vector<8x1xf32> to vector<1x8x1xf32>
    %cst_12 = arith.constant dense<0.000000e+00> : vector<1xf32>
    %37 = vector.multi_reduction <add>, %36, %cst_12 [1, 2] : vector<1x8x1xf32> to vector<1xf32>
    %38 = vector.shape_cast %37 : vector<1xf32> to vector<1x1x1xf32>
    %39 = vector.extract %38[0, 0, 0] : f32 from vector<1x1x1xf32>
    %40 = vector.broadcast %39 : f32 to vector<1x1xf32>
    %41 = vector.shape_cast %40 : vector<1x1xf32> to vector<1x1x1xf32>
    %42 = arith.addf %35, %41 : vector<1x1x1xf32>
    %c0_13 = arith.constant 0 : index
    %c0_14 = arith.constant 0 : index
    %c0_15 = arith.constant 0 : index
    %43 = vector.load %arg4[%c0_13, %c0_14, %c0_15] : memref<1x1x1xf32, #tpu.memory_space<vmem>>, vector<1x1x1xf32>
    tpu.vector_store %arg4[%c0_13, %c0_14, %c0_15], %42 {strides = array<i32>} : memref<1x1x1xf32, #tpu.memory_space<vmem>>, vector<1x1x1xf32>,
    return
  }
  func.func @transform_0(%arg0: i32, %arg1: i32) -> (i32, i32) {
    %c1_i32 = arith.constant 1 : i32
    %0 = arith.muli %arg0, %c1_i32 : i32
    %1 = arith.addi %0, %arg1 : i32
    %c0_i32 = arith.constant 0 : i32
    %2 = arith.minsi %1, %c0_i32 : i32
    %c0_i32_0 = arith.constant 0 : i32
    %c0_i32_1 = arith.constant 0 : i32
    return %2, %c0_i32_0 : i32, i32
  }
  func.func @transform_1(%arg0: i32, %arg1: i32) -> (i32, i32) {
    %c1_i32 = arith.constant 1 : i32
    %0 = arith.muli %arg0, %c1_i32 : i32
    %1 = arith.addi %0, %arg1 : i32
    %c0_i32 = arith.constant 0 : i32
    %2 = arith.minsi %1, %c0_i32 : i32
    %c0_i32_0 = arith.constant 0 : i32
    %c0_i32_1 = arith.constant 0 : i32
    return %2, %c0_i32_0 : i32, i32
  }
  func.func @transform_2(%arg0: i32, %arg1: i32) -> (i32, i32, i32) {
    %c0_i32 = arith.constant 0 : i32
    %c0_i32_0 = arith.constant 0 : i32
    %c0_i32_1 = arith.constant 0 : i32
    return %arg0, %c0_i32, %c0_i32_0 : i32, i32, i32
  }
}

</mosaic_0001>

<llo_original>
// kernel: tpu_custom_call.1
$region0: #{tpu_custom_call.1}
  #allocation0 [shape = 'u32[]', space=smem, size = 0x4, offset = 0x4, fixed_abs, tag = 'smem constant byte address 0x4 - core index']
  #allocation1 [shape = 'u32[144,128]{1,0:T(1,128)}', space=vmem, size = 0x12000, scoped, tag = 'internal scratch']
  %s0 = inlined_call_operand.vmem [shape: f32[8,128], index: 0, kind: input, shape index: {}]
  %s1 = inlined_call_operand.vmem [shape: s32[8,1], index: 1, kind: input, shape index: {}]
  %s2 = inlined_call_operand.hbm [shape: f32[1,1,1], index: 2, kind: output, shape index: {}]
  %s3 = sld [smem:[#allocation0]]
  $region22: #{tpu_custom_call.1} parent=0
    _
  %s5 = ssub.s32 1, %s3
  %s6 = scalar_select 0, %s5, %s3
  $region1: #{tpu_custom_call.1} parent=0
    #allocation2 [shape = 'u8[512]{0}', space=vmem, size = 0x400, scoped, tag = 'output window, operand 0, single buffered']
    #allocation3 [shape = 's32[1]{0}', space=sflag, size = 0x4, scoped, tag = 'scoped memory for tpu_custom_call.1']
    %7 = vsyncpa [#allocation3], 0
    // Predicated region
    $region2: #{tpu_custom_call.1} parent=1 // pred_check
      _
    $region3: #{tpu_custom_call.1} parent=1 // pred_check_branch
      %9 = sbr.rel (0) target = $region5
    $region4: #{tpu_custom_call.1} parent=1 // pred_region
      %s10 = sadd.s32 0, 0
      %p11 = scmp.lt.s32.totalorder %s10, 0
      %s12 = scalar_select %p11, %s10, 0
      %p13 = scmp.lt.s32.totalorder %s12, 0
      %s14 = scalar_select %p13, %s12, 0
      %s15 = smul.addr %s14, 8
      %s16 = scalar_lea.vmem %s0, %s15
      %s17 = sadd.s32 0, 0
      %p18 = scmp.lt.s32.totalorder %s17, 0
      %s19 = scalar_select %p18, %s17, 0
    $region5: #{tpu_custom_call.1} parent=1 // pred_fallthru
      _
    // Predicated region
    $region6: #{tpu_custom_call.1} parent=1 // pred_check
      _
    $region7: #{tpu_custom_call.1} parent=1 // pred_check_branch
      %21 = sbr.rel (0) target = $region9
    $region8: #{tpu_custom_call.1} parent=1 // pred_region
      %s22 = sadd.s32 0, 0
      %p23 = scmp.lt.s32.totalorder %s22, 0
      %s24 = scalar_select %p23, %s22, 0
      %p25 = scmp.lt.s32.totalorder %s24, 0
      %s26 = scalar_select %p25, %s24, 0
      %s27 = smul.addr %s26, 8
      %s28 = scalar_lea.vmem %s1, %s27
      %s29 = sadd.s32 0, 0
      %p30 = scmp.lt.s32.totalorder %s29, 0
      %s31 = scalar_select %p30, %s29, 0
    $region9: #{tpu_custom_call.1} parent=1 // pred_fallthru
      _
    %s32 = sadd.s32 0, 0
    %p33 = scmp.lt.s32.totalorder %s32, 0
    %s34 = scalar_select %p33, %s32, 0
    %p35 = scmp.lt.s32.totalorder %s34, 0
    %s36 = scalar_select %p35, %s34, 0
    %s37 = smul.addr %s36, 8
    %s38 = scalar_lea.vmem %s0, %s37
    %s39 = sadd.s32 0, 0
    %p40 = scmp.lt.s32.totalorder %s39, 0
    %s41 = scalar_select %p40, %s39, 0
    %p42 = scmp.lt.s32.totalorder %s41, 0
    %s43 = scalar_select %p42, %s41, 0
    %s44 = smul.addr %s43, 8
    %s45 = scalar_lea.vmem %s1, %s44
    %s46 = sadd.s32 0, 0
    %p47 = scmp.lt.s32.totalorder %s46, 0
    %s48 = scalar_select %p47, %s46, 0
    %p49 = scmp.lt.s32.totalorder %s48, 0
    %s50 = scalar_select %p49, %s48, 0
    %s51 = smul.addr %s50, 8
    %s52 = scalar_lea.vmem %s0, %s51
    %s53 = sadd.s32 0, 0
    %p54 = scmp.lt.s32.totalorder %s53, 0
    %s55 = scalar_select %p54, %s53, 0
    %s56 = sadd.s32 0, 0
    %p57 = scmp.lt.s32.totalorder %s56, 0
    %s58 = scalar_select %p57, %s56, 0
    %p59 = scmp.lt.s32.totalorder %s58, 0
    %s60 = scalar_select %p59, %s58, 0
    %s61 = smul.addr %s60, 8
    %s62 = scalar_lea.vmem %s1, %s61
    %s63 = sadd.s32 0, 0
    %p64 = scmp.lt.s32.totalorder %s63, 0
    %s65 = scalar_select %p64, %s63, 0
    %p66 = scmp.eq.s32.totalorder 0, 0
    // Predicated region
    $region10: #{tpu_custom_call.1} parent=1 // pred_check
      %p67 = pneg %p66
    $region11: #{tpu_custom_call.1} parent=1 // pred_check_branch
      %69 = sbr.rel (%p67) target = $region13
    $region12: #{tpu_custom_call.1} parent=1 // pred_region
      %vm70 = vcmask 0
      %71 = vst.msk [vmem:[#allocation2] sm:$0x1] %vm70, 0.0
    $region13: #{tpu_custom_call.1} parent=1 // pred_fallthru
      _
    %v72 = vld [vmem:[%s52] sm:$0xff]
    %v73 = vld [vmem:[%s62] sm:$0xff]
    %s74 = sadd.s32 0, 0
    %s75 = smul.u32 %s74, 8
    %v76 = vlaneseq
    %v77 = vshrl.u32 %v76, 7
    %v78 = vstv %s75
    %v79 = vadd.s32 %v77, %v78
    %vm80 = vcmp.lt.s32.totalorder %v79, 8
    %81 = vmax.xlane.f32.xlu0 %v72
    %v82 = vpop.xlane.xlu0 %81
    %v83 = vsub.f32 %v72, %v82
    %v84 = vmul.f32 %v83, 1.442695
    %v85 = vpow.pop %v84
    %v86 = vlaneseq
    %v87 = vand.u32 %v86, 127
    %88 = vset.pattern.permute.xlu0 0
    %89 = vperm.xlu0 %88, %v73
    %v90 = vpop.permute.xlu0 %89
    %vm91 = vcmp.eq.s32.totalorder %v87, %v90
    %v92 = vsel %vm80, 1, 0
    %vm93 = vcmp.eq.s32.totalorder %v92, 1
    %vm94 = vmand %vm91, %vm93
    %v95 = vsel %vm94, %v72, 0.0
    %96 = vmatprep.subr.mxu0 0.0
    %97 = vmatpush1.msra.mxu0 1.0
    %98 = vmatprep.subr.mxu0 0.0
    %99 = vmatpush1.msra.mxu0 1.0
    %100 = vmatprep.subr.mxu0 0.0
    %101 = vmatpush1.msra.mxu0 1.0
    %102 = vmatprep.subr.mxu0 0.0
    %103 = vmatpush1.msra.mxu0 1.0
    %104 = vmatprep.subr.mxu0 0.0
    %105 = vmatpush1.msra.mxu0 1.0
    %106 = vmatprep.subr.mxu0 0.0
    %107 = vmatpush1.msra.mxu0 1.0
    %108 = vmatprep.subr.mxu0 0.0
    %109 = vmatpush1.msra.mxu0 1.0
    %110 = vmatprep.subr.mxu0 0.0
    %111 = vmatpush1.msra.mxu0 1.0
    %112 = vmatprep.subr.mxu0 0.0
    %113 = vmatpush1.msra.mxu0 1.0
    %114 = vmatprep.subr.mxu0 0.0
    %115 = vmatpush1.msra.mxu0 1.0
    %116 = vmatprep.subr.mxu0 0.0
    %117 = vmatpush1.msra.mxu0 1.0
    %118 = vmatprep.subr.mxu0 0.0
    %119 = vmatpush1.msra.mxu0 1.0
    %120 = vmatprep.subr.mxu0 0.0
    %121 = vmatpush1.msra.mxu0 1.0
    %122 = vmatprep.subr.mxu0 0.0
    %123 = vmatpush1.msra.mxu0 1.0
    %124 = vmatprep.subr.mxu0 0.0
    %125 = vmatpush1.msra.mxu0 1.0
    %126 = vmatprep.subr.mxu0 0.0
    %127 = vmatpush1.msra.mxu0 1.0
    %128 = vmatprep.subr.mxu0 0.0
    %129 = vmatpush1.msra.mxu0 0.0
    %130 = vmatprep.subr.mxu0 0.0
    %131 = vmatpush1.msra.mxu0 0.0
    %132 = vmatprep.subr.mxu0 0.0
    %133 = vmatpush1.msra.mxu0 0.0
    %134 = vmatprep.subr.mxu0 0.0
    %135 = vmatpush1.msra.mxu0 0.0
    %136 = vmatprep.subr.mxu0 0.0
    %137 = vmatpush1.msra.mxu0 0.0
    %138 = vmatprep.subr.mxu0 0.0
    %139 = vmatpush1.msra.mxu0 0.0
    %140 = vmatprep.subr.mxu0 0.0
    %141 = vmatpush1.msra.mxu0 0.0
    %142 = vmatprep.subr.mxu0 0.0
    %143 = vmatpush1.msra.mxu0 0.0
    %144 = vmatprep.subr.mxu0 0.0
    %145 = vmatpush1.msra.mxu0 0.0
    %146 = vmatprep.subr.mxu0 0.0
    %147 = vmatpush1.msra.mxu0 0.0
    %148 = vmatprep.subr.mxu0 0.0
    %149 = vmatpush1.msra.mxu0 0.0
    %150 = vmatprep.subr.mxu0 0.0
    %151 = vmatpush1.msra.mxu0 0.0
    %152 = vmatprep.subr.mxu0 0.0
    %153 = vmatpush1.msra.mxu0 0.0
    %154 = vmatprep.subr.mxu0 0.0
    %155 = vmatpush1.msra.mxu0 0.0
    %156 = vmatprep.subr.mxu0 0.0
    %157 = vmatpush1.msra.mxu0 0.0
    %158 = vmatprep.subr.mxu0 0.0
    %159 = vmatpush1.msra.mxu0 0.0
    %160 = vmatprep.mubr.f32.mxu0 0.0
    %v161 = vand.u32 %v85, 4294901760
    %v162 = vsub.f32 %v85, %v161
    %v163 = vand.u32 %v162, 4294901760
    %v164 = vsub.f32 %v162, %v163
    %v165 = vand.u32 %v164, 4294901760
    %166 = vmatmul.mubr.f32.gmra.mrb[0].mxu0 %v165
    %v167 = vpop.f32.mrb[0].mxu0
    %v168 = vadd.f32 0.0, %v167
    %v169 = vpop.f32.mrb[0].mxu0
    %170 = vdwg.mxu0
    %171 = vmatprep.subr.mxu0 0.0
    %172 = vmatpush1.msra.mxu0 0.0
    %173 = vmatprep.subr.mxu0 0.0
    %174 = vmatpush1.msra.mxu0 0.0
    %175 = vmatprep.subr.mxu0 0.0
    %176 = vmatpush1.msra.mxu0 0.0
    %177 = vmatprep.subr.mxu0 0.0
    %178 = vmatpush1.msra.mxu0 0.0
    %179 = vmatprep.subr.mxu0 0.0
    %180 = vmatpush1.msra.mxu0 0.0
    %181 = vmatprep.subr.mxu0 0.0
    %182 = vmatpush1.msra.mxu0 0.0
    %183 = vmatprep.subr.mxu0 0.0
    %184 = vmatpush1.msra.mxu0 0.0
    %185 = vmatprep.subr.mxu0 0.0
    %186 = vmatpush1.msra.mxu0 0.0
    %187 = vmatprep.subr.mxu0 0.0
    %188 = vmatpush1.msra.mxu0 0.0
    %189 = vmatprep.subr.mxu0 0.0
    %190 = vmatpush1.msra.mxu0 0.0
    %191 = vmatprep.subr.mxu0 0.0
    %192 = vmatpush1.msra.mxu0 0.0
    %193 = vmatprep.subr.mxu0 0.0
    %194 = vmatpush1.msra.mxu0 0.0
    %195 = vmatprep.subr.mxu0 0.0
    %196 = vmatpush1.msra.mxu0 0.0
    %197 = vmatprep.subr.mxu0 0.0
    %198 = vmatpush1.msra.mxu0 0.0
    %199 = vmatprep.subr.mxu0 0.0
    %200 = vmatpush1.msra.mxu0 0.0
    %201 = vmatprep.subr.mxu0 0.0
    %202 = vmatpush1.msra.mxu0 0.0
    %203 = vmatprep.subr.mxu0 0.0
    %204 = vmatpush1.msra.mxu0 0.0
    %205 = vmatprep.subr.mxu0 0.0
    %206 = vmatpush1.msra.mxu0 0.0
    %207 = vmatprep.subr.mxu0 0.0
    %208 = vmatpush1.msra.mxu0 0.0
    %209 = vmatprep.subr.mxu0 0.0
    %210 = vmatpush1.msra.mxu0 0.0
    %211 = vmatprep.subr.mxu0 0.0
    %212 = vmatpush1.msra.mxu0 0.0
    %213 = vmatprep.subr.mxu0 0.0
    %214 = vmatpush1.msra.mxu0 0.0
    %215 = vmatprep.subr.mxu0 0.0
    %216 = vmatpush1.msra.mxu0 0.0
    %217 = vmatprep.subr.mxu0 0.0
    %218 = vmatpush1.msra.mxu0 0.0
    %219 = vmatprep.subr.mxu0 0.0
    %220 = vmatpush1.msra.mxu0 0.0
    %221 = vmatprep.subr.mxu0 0.0
    %222 = vmatpush1.msra.mxu0 0.0
    %223 = vmatprep.subr.mxu0 0.0
    %224 = vmatpush1.msra.mxu0 0.0
    %225 = vmatprep.subr.mxu0 0.0
    %226 = vmatpush1.msra.mxu0 0.0
    %227 = vmatprep.subr.mxu0 0.0
    %228 = vmatpush1.msra.mxu0 0.0
    %229 = vmatprep.subr.mxu0 0.0
    %230 = vmatpush1.msra.mxu0 0.0
    %231 = vmatprep.subr.mxu0 0.0
    %232 = vmatpush1.msra.mxu0 0.0
    %233 = vmatprep.subr.mxu0 0.0
    %234 = vmatpush1.msra.mxu0 0.0
    %235 = vmatprep.mubr.f32.mxu0 0.0
    %v236 = vand.u32 %v85, 4294901760
    %237 = vmatmul.mubr.f32.gmra.mrb[0].mxu0 %v236
    %v238 = vpop.f32.mrb[0].mxu0
    %v239 = vadd.f32 %v168, %v238
    %v240 = vpop.f32.mrb[0].mxu0
    %241 = vdwg.mxu0
    %242 = vmatprep.subr.mxu0 0.0
    %243 = vmatpush1.msra.mxu0 0.0
    %244 = vmatprep.subr.mxu0 0.0
    %245 = vmatpush1.msra.mxu0 0.0
    %246 = vmatprep.subr.mxu0 0.0
    %247 = vmatpush1.msra.mxu0 0.0
    %248 = vmatprep.subr.mxu0 0.0
    %249 = vmatpush1.msra.mxu0 0.0
    %250 = vmatprep.subr.mxu0 0.0
    %251 = vmatpush1.msra.mxu0 0.0
    %252 = vmatprep.subr.mxu0 0.0
    %253 = vmatpush1.msra.mxu0 0.0
    %254 = vmatprep.subr.mxu0 0.0
    %255 = vmatpush1.msra.mxu0 0.0
    %256 = vmatprep.subr.mxu0 0.0
    %257 = vmatpush1.msra.mxu0 0.0
    %258 = vmatprep.subr.mxu0 0.0
    %259 = vmatpush1.msra.mxu0 0.0
    %260 = vmatprep.subr.mxu0 0.0
    %261 = vmatpush1.msra.mxu0 0.0
    %262 = vmatprep.subr.mxu0 0.0
    %263 = vmatpush1.msra.mxu0 0.0
    %264 = vmatprep.subr.mxu0 0.0
    %265 = vmatpush1.msra.mxu0 0.0
    %266 = vmatprep.subr.mxu0 0.0
    %267 = vmatpush1.msra.mxu0 0.0
    %268 = vmatprep.subr.mxu0 0.0
    %269 = vmatpush1.msra.mxu0 0.0
    %270 = vmatprep.subr.mxu0 0.0
    %271 = vmatpush1.msra.mxu0 0.0
    %272 = vmatprep.subr.mxu0 0.0
    %273 = vmatpush1.msra.mxu0 0.0
    %274 = vmatprep.subr.mxu0 0.0
    %275 = vmatpush1.msra.mxu0 0.0
    %276 = vmatprep.subr.mxu0 0.0
    %277 = vmatpush1.msra.mxu0 0.0
    %278 = vmatprep.subr.mxu0 0.0
    %279 = vmatpush1.msra.mxu0 0.0
    %280 = vmatprep.subr.mxu0 0.0
    %281 = vmatpush1.msra.mxu0 0.0
    %282 = vmatprep.subr.mxu0 0.0
    %283 = vmatpush1.msra.mxu0 0.0
    %284 = vmatprep.subr.mxu0 0.0
    %285 = vmatpush1.msra.mxu0 0.0
    %286 = vmatprep.subr.mxu0 0.0
    %287 = vmatpush1.msra.mxu0 0.0
    %288 = vmatprep.subr.mxu0 0.0
    %289 = vmatpush1.msra.mxu0 0.0
    %290 = vmatprep.subr.mxu0 0.0
    %291 = vmatpush1.msra.mxu0 0.0
    %292 = vmatprep.subr.mxu0 0.0
    %293 = vmatpush1.msra.mxu0 0.0
    %294 = vmatprep.subr.mxu0 0.0
    %295 = vmatpush1.msra.mxu0 0.0
    %296 = vmatprep.subr.mxu0 0.0
    %297 = vmatpush1.msra.mxu0 0.0
    %298 = vmatprep.subr.mxu0 0.0
    %299 = vmatpush1.msra.mxu0 0.0
    %300 = vmatprep.subr.mxu0 0.0
    %301 = vmatpush1.msra.mxu0 0.0
    %302 = vmatprep.subr.mxu0 0.0
    %303 = vmatpush1.msra.mxu0 0.0
    %304 = vmatprep.subr.mxu0 0.0
    %305 = vmatpush1.msra.mxu0 0.0
    %306 = vmatprep.mubr.f32.mxu0 0.0
    %v307 = vand.u32 %v85, 4294901760
    %v308 = vsub.f32 %v85, %v307
    %309 = vmatmul.mubr.f32.gmra.mrb[0].mxu0 %v308
    %v310 = vpop.f32.mrb[0].mxu0
    %v311 = vadd.f32 %v239, %v310
    %v312 = vpop.f32.mrb[0].mxu0
    %313 = vdwg.mxu0
    %314 = vmatprep.subr.mxu0 0.0
    %315 = vmatpush1.msra.mxu0 1.0
    %316 = vmatprep.subr.mxu0 0.0
    %317 = vmatpush1.msra.mxu0 1.0
    %318 = vmatprep.subr.mxu0 0.0
    %319 = vmatpush1.msra.mxu0 1.0
    %320 = vmatprep.subr.mxu0 0.0
    %321 = vmatpush1.msra.mxu0 1.0
    %322 = vmatprep.subr.mxu0 0.0
    %323 = vmatpush1.msra.mxu0 1.0
    %324 = vmatprep.subr.mxu0 0.0
    %325 = vmatpush1.msra.mxu0 1.0
    %326 = vmatprep.subr.mxu0 0.0
    %327 = vmatpush1.msra.mxu0 1.0
    %328 = vmatprep.subr.mxu0 0.0
    %329 = vmatpush1.msra.mxu0 1.0
    %330 = vmatprep.subr.mxu0 0.0
    %331 = vmatpush1.msra.mxu0 1.0
    %332 = vmatprep.subr.mxu0 0.0
    %333 = vmatpush1.msra.mxu0 1.0
    %334 = vmatprep.subr.mxu0 0.0
    %335 = vmatpush1.msra.mxu0 1.0
    %336 = vmatprep.subr.mxu0 0.0
    %337 = vmatpush1.msra.mxu0 1.0
    %338 = vmatprep.subr.mxu0 0.0
    %339 = vmatpush1.msra.mxu0 1.0
    %340 = vmatprep.subr.mxu0 0.0
    %341 = vmatpush1.msra.mxu0 1.0
    %342 = vmatprep.subr.mxu0 0.0
    %343 = vmatpush1.msra.mxu0 1.0
    %344 = vmatprep.subr.mxu0 0.0
    %345 = vmatpush1.msra.mxu0 1.0
    %346 = vmatprep.subr.mxu0 0.0
    %347 = vmatpush1.msra.mxu0 0.0
    %348 = vmatprep.subr.mxu0 0.0
    %349 = vmatpush1.msra.mxu0 0.0
    %350 = vmatprep.subr.mxu0 0.0
    %351 = vmatpush1.msra.mxu0 0.0
    %352 = vmatprep.subr.mxu0 0.0
    %353 = vmatpush1.msra.mxu0 0.0
    %354 = vmatprep.subr.mxu0 0.0
    %355 = vmatpush1.msra.mxu0 0.0
    %356 = vmatprep.subr.mxu0 0.0
    %357 = vmatpush1.msra.mxu0 0.0
    %358 = vmatprep.subr.mxu0 0.0
    %359 = vmatpush1.msra.mxu0 0.0
    %360 = vmatprep.subr.mxu0 0.0
    %361 = vmatpush1.msra.mxu0 0.0
    %362 = vmatprep.subr.mxu0 0.0
    %363 = vmatpush1.msra.mxu0 0.0
    %364 = vmatprep.subr.mxu0 0.0
    %365 = vmatpush1.msra.mxu0 0.0
    %366 = vmatprep.subr.mxu0 0.0
    %367 = vmatpush1.msra.mxu0 0.0
    %368 = vmatprep.subr.mxu0 0.0
    %369 = vmatpush1.msra.mxu0 0.0
    %370 = vmatprep.subr.mxu0 0.0
    %371 = vmatpush1.msra.mxu0 0.0
    %372 = vmatprep.subr.mxu0 0.0
    %373 = vmatpush1.msra.mxu0 0.0
    %374 = vmatprep.subr.mxu0 0.0
    %375 = vmatpush1.msra.mxu0 0.0
    %376 = vmatprep.subr.mxu0 0.0
    %377 = vmatpush1.msra.mxu0 0.0
    %378 = vmatprep.mubr.f32.mxu0 0.0
    %v379 = vand.u32 %v85, 4294901760
    %v380 = vsub.f32 %v85, %v379
    %v381 = vand.u32 %v380, 4294901760
    %382 = vmatmul.mubr.f32.gmra.mrb[0].mxu0 %v381
    %v383 = vpop.f32.mrb[0].mxu0
    %v384 = vadd.f32 %v311, %v383
    %v385 = vpop.f32.mrb[0].mxu0
    %386 = vdwg.mxu0
    %387 = vmatprep.subr.mxu0 0.0
    %388 = vmatpush1.msra.mxu0 0.0
    %389 = vmatprep.subr.mxu0 0.0
    %390 = vmatpush1.msra.mxu0 0.0
    %391 = vmatprep.subr.mxu0 0.0
    %392 = vmatpush1.msra.mxu0 0.0
    %393 = vmatprep.subr.mxu0 0.0
    %394 = vmatpush1.msra.mxu0 0.0
    %395 = vmatprep.subr.mxu0 0.0
    %396 = vmatpush1.msra.mxu0 0.0
    %397 = vmatprep.subr.mxu0 0.0
    %398 = vmatpush1.msra.mxu0 0.0
    %399 = vmatprep.subr.mxu0 0.0
    %400 = vmatpush1.msra.mxu0 0.0
    %401 = vmatprep.subr.mxu0 0.0
    %402 = vmatpush1.msra.mxu0 0.0
    %403 = vmatprep.subr.mxu0 0.0
    %404 = vmatpush1.msra.mxu0 0.0
    %405 = vmatprep.subr.mxu0 0.0
    %406 = vmatpush1.msra.mxu0 0.0
    %407 = vmatprep.subr.mxu0 0.0
    %408 = vmatpush1.msra.mxu0 0.0
    %409 = vmatprep.subr.mxu0 0.0
    %410 = vmatpush1.msra.mxu0 0.0
    %411 = vmatprep.subr.mxu0 0.0
    %412 = vmatpush1.msra.mxu0 0.0
    %413 = vmatprep.subr.mxu0 0.0
    %414 = vmatpush1.msra.mxu0 0.0
    %415 = vmatprep.subr.mxu0 0.0
    %416 = vmatpush1.msra.mxu0 0.0
    %417 = vmatprep.subr.mxu0 0.0
    %418 = vmatpush1.msra.mxu0 0.0
    %419 = vmatprep.subr.mxu0 0.0
    %420 = vmatpush1.msra.mxu0 0.0
    %421 = vmatprep.subr.mxu0 0.0
    %422 = vmatpush1.msra.mxu0 0.0
    %423 = vmatprep.subr.mxu0 0.0
    %424 = vmatpush1.msra.mxu0 0.0
    %425 = vmatprep.subr.mxu0 0.0
    %426 = vmatpush1.msra.mxu0 0.0
    %427 = vmatprep.subr.mxu0 0.0
    %428 = vmatpush1.msra.mxu0 0.0
    %429 = vmatprep.subr.mxu0 0.0
    %430 = vmatpush1.msra.mxu0 0.0
    %431 = vmatprep.subr.mxu0 0.0
    %432 = vmatpush1.msra.mxu0 0.0
    %433 = vmatprep.subr.mxu0 0.0
    %434 = vmatpush1.msra.mxu0 0.0
    %435 = vmatprep.subr.mxu0 0.0
    %436 = vmatpush1.msra.mxu0 0.0
    %437 = vmatprep.subr.mxu0 0.0
    %438 = vmatpush1.msra.mxu0 0.0
    %439 = vmatprep.subr.mxu0 0.0
    %440 = vmatpush1.msra.mxu0 0.0
    %441 = vmatprep.subr.mxu0 0.0
    %442 = vmatpush1.msra.mxu0 0.0
    %443 = vmatprep.subr.mxu0 0.0
    %444 = vmatpush1.msra.mxu0 0.0
    %445 = vmatprep.subr.mxu0 0.0
    %446 = vmatpush1.msra.mxu0 0.0
    %447 = vmatprep.subr.mxu0 0.0
    %448 = vmatpush1.msra.mxu0 0.0
    %449 = vmatprep.subr.mxu0 0.0
    %450 = vmatpush1.msra.mxu0 0.0
    %451 = vmatprep.mubr.f32.mxu0 0.0
    %v452 = vand.u32 %v85, 4294901760
    %453 = vmatmul.mubr.f32.gmra.mrb[0].mxu0 %v452
    %v454 = vpop.f32.mrb[0].mxu0
    %v455 = vadd.f32 %v384, %v454
    %v456 = vpop.f32.mrb[0].mxu0
    %457 = vdwg.mxu0
    %458 = vmatprep.subr.mxu0 0.0
    %459 = vmatpush1.msra.mxu0 1.0
    %460 = vmatprep.subr.mxu0 0.0
    %461 = vmatpush1.msra.mxu0 1.0
    %462 = vmatprep.subr.mxu0 0.0
    %463 = vmatpush1.msra.mxu0 1.0
    %464 = vmatprep.subr.mxu0 0.0
    %465 = vmatpush1.msra.mxu0 1.0
    %466 = vmatprep.subr.mxu0 0.0
    %467 = vmatpush1.msra.mxu0 1.0
    %468 = vmatprep.subr.mxu0 0.0
    %469 = vmatpush1.msra.mxu0 1.0
    %470 = vmatprep.subr.mxu0 0.0
    %471 = vmatpush1.msra.mxu0 1.0
    %472 = vmatprep.subr.mxu0 0.0
    %473 = vmatpush1.msra.mxu0 1.0
    %474 = vmatprep.subr.mxu0 0.0
    %475 = vmatpush1.msra.mxu0 1.0
    %476 = vmatprep.subr.mxu0 0.0
    %477 = vmatpush1.msra.mxu0 1.0
    %478 = vmatprep.subr.mxu0 0.0
    %479 = vmatpush1.msra.mxu0 1.0
    %480 = vmatprep.subr.mxu0 0.0
    %481 = vmatpush1.msra.mxu0 1.0
    %482 = vmatprep.subr.mxu0 0.0
    %483 = vmatpush1.msra.mxu0 1.0
    %484 = vmatprep.subr.mxu0 0.0
    %485 = vmatpush1.msra.mxu0 1.0
    %486 = vmatprep.subr.mxu0 0.0
    %487 = vmatpush1.msra.mxu0 1.0
    %488 = vmatprep.subr.mxu0 0.0
    %489 = vmatpush1.msra.mxu0 1.0
    %490 = vmatprep.subr.mxu0 0.0
    %491 = vmatpush1.msra.mxu0 0.0
    %492 = vmatprep.subr.mxu0 0.0
    %493 = vmatpush1.msra.mxu0 0.0
    %494 = vmatprep.subr.mxu0 0.0
    %495 = vmatpush1.msra.mxu0 0.0
    %496 = vmatprep.subr.mxu0 0.0
    %497 = vmatpush1.msra.mxu0 0.0
    %498 = vmatprep.subr.mxu0 0.0
    %499 = vmatpush1.msra.mxu0 0.0
    %500 = vmatprep.subr.mxu0 0.0
    %501 = vmatpush1.msra.mxu0 0.0
    %502 = vmatprep.subr.mxu0 0.0
    %503 = vmatpush1.msra.mxu0 0.0
    %504 = vmatprep.subr.mxu0 0.0
    %505 = vmatpush1.msra.mxu0 0.0
    %506 = vmatprep.subr.mxu0 0.0
    %507 = vmatpush1.msra.mxu0 0.0
    %508 = vmatprep.subr.mxu0 0.0
    %509 = vmatpush1.msra.mxu0 0.0
    %510 = vmatprep.subr.mxu0 0.0
    %511 = vmatpush1.msra.mxu0 0.0
    %512 = vmatprep.subr.mxu0 0.0
    %513 = vmatpush1.msra.mxu0 0.0
    %514 = vmatprep.subr.mxu0 0.0
    %515 = vmatpush1.msra.mxu0 0.0
    %516 = vmatprep.subr.mxu0 0.0
    %517 = vmatpush1.msra.mxu0 0.0
    %518 = vmatprep.subr.mxu0 0.0
    %519 = vmatpush1.msra.mxu0 0.0
    %520 = vmatprep.subr.mxu0 0.0
    %521 = vmatpush1.msra.mxu0 0.0
    %522 = vmatprep.mubr.f32.mxu0 0.0
    %v523 = vand.u32 %v85, 4294901760
    %524 = vmatmul.mubr.f32.gmra.mrb[0].mxu0 %v523
    %v525 = vpop.f32.mrb[0].mxu0
    %v526 = vadd.f32 %v455, %v525
    %v527 = vpop.f32.mrb[0].mxu0
    %528 = vdwg.mxu0
    %529 = vmatprep.subr.mxu0 0.0
    %530 = vmatpush1.msra.mxu0 1.0
    %531 = vmatprep.subr.mxu0 0.0
    %532 = vmatpush1.msra.mxu0 1.0
    %533 = vmatprep.subr.mxu0 0.0
    %534 = vmatpush1.msra.mxu0 1.0
    %535 = vmatprep.subr.mxu0 0.0
    %536 = vmatpush1.msra.mxu0 1.0
    %537 = vmatprep.subr.mxu0 0.0
    %538 = vmatpush1.msra.mxu0 1.0
    %539 = vmatprep.subr.mxu0 0.0
    %540 = vmatpush1.msra.mxu0 1.0
    %541 = vmatprep.subr.mxu0 0.0
    %542 = vmatpush1.msra.mxu0 1.0
    %543 = vmatprep.subr.mxu0 0.0
    %544 = vmatpush1.msra.mxu0 1.0
    %545 = vmatprep.subr.mxu0 0.0
    %546 = vmatpush1.msra.mxu0 1.0
    %547 = vmatprep.subr.mxu0 0.0
    %548 = vmatpush1.msra.mxu0 1.0
    %549 = vmatprep.subr.mxu0 0.0
    %550 = vmatpush1.msra.mxu0 1.0
    %551 = vmatprep.subr.mxu0 0.0
    %552 = vmatpush1.msra.mxu0 1.0
    %553 = vmatprep.subr.mxu0 0.0
    %554 = vmatpush1.msra.mxu0 1.0
    %555 = vmatprep.subr.mxu0 0.0
    %556 = vmatpush1.msra.mxu0 1.0
    %557 = vmatprep.subr.mxu0 0.0
    %558 = vmatpush1.msra.mxu0 1.0
    %559 = vmatprep.subr.mxu0 0.0
    %560 = vmatpush1.msra.mxu0 1.0
    %561 = vmatprep.subr.mxu0 0.0
    %562 = vmatpush1.msra.mxu0 0.0
    %563 = vmatprep.subr.mxu0 0.0
    %564 = vmatpush1.msra.mxu0 0.0
    %565 = vmatprep.subr.mxu0 0.0
    %566 = vmatpush1.msra.mxu0 0.0
    %567 = vmatprep.subr.mxu0 0.0
    %568 = vmatpush1.msra.mxu0 0.0
    %569 = vmatprep.subr.mxu0 0.0
    %570 = vmatpush1.msra.mxu0 0.0
    %571 = vmatprep.subr.mxu0 0.0
    %572 = vmatpush1.msra.mxu0 0.0
    %573 = vmatprep.subr.mxu0 0.0
    %574 = vmatpush1.msra.mxu0 0.0
    %575 = vmatprep.subr.mxu0 0.0
    %576 = vmatpush1.msra.mxu0 0.0
    %577 = vmatprep.subr.mxu0 0.0
    %578 = vmatpush1.msra.mxu0 0.0
    %579 = vmatprep.subr.mxu0 0.0
    %580 = vmatpush1.msra.mxu0 0.0
    %581 = vmatprep.subr.mxu0 0.0
    %582 = vmatpush1.msra.mxu0 0.0
    %583 = vmatprep.subr.mxu0 0.0
    %584 = vmatpush1.msra.mxu0 0.0
    %585 = vmatprep.subr.mxu0 0.0
    %586 = vmatpush1.msra.mxu0 0.0
    %587 = vmatprep.subr.mxu0 0.0
    %588 = vmatpush1.msra.mxu0 0.0
    %589 = vmatprep.subr.mxu0 0.0
    %590 = vmatpush1.msra.mxu0 0.0
    %591 = vmatprep.subr.mxu0 0.0
    %592 = vmatpush1.msra.mxu0 0.0
    %593 = vmatprep.mubr.f32.mxu0 0.0
    %v594 = vand.u32 %v95, 4294901760
    %v595 = vsub.f32 %v95, %v594
    %v596 = vand.u32 %v595, 4294901760
    %v597 = vsub.f32 %v595, %v596
    %v598 = vand.u32 %v597, 4294901760
    %599 = vmatmul.mubr.f32.gmra.mrb[0].mxu0 %v598
    %v600 = vpop.f32.mrb[0].mxu0
    %v601 = vadd.f32 0.0, %v600
    %v602 = vpop.f32.mrb[0].mxu0
    %603 = vdwg.mxu0
    %604 = vmatprep.subr.mxu0 0.0
    %605 = vmatpush1.msra.mxu0 0.0
    %606 = vmatprep.subr.mxu0 0.0
    %607 = vmatpush1.msra.mxu0 0.0
    %608 = vmatprep.subr.mxu0 0.0
    %609 = vmatpush1.msra.mxu0 0.0
    %610 = vmatprep.subr.mxu0 0.0
    %611 = vmatpush1.msra.mxu0 0.0
    %612 = vmatprep.subr.mxu0 0.0
    %613 = vmatpush1.msra.mxu0 0.0
    %614 = vmatprep.subr.mxu0 0.0
    %615 = vmatpush1.msra.mxu0 0.0
    %616 = vmatprep.subr.mxu0 0.0
    %617 = vmatpush1.msra.mxu0 0.0
    %618 = vmatprep.subr.mxu0 0.0
    %619 = vmatpush1.msra.mxu0 0.0
    %620 = vmatprep.subr.mxu0 0.0
    %621 = vmatpush1.msra.mxu0 0.0
    %622 = vmatprep.subr.mxu0 0.0
    %623 = vmatpush1.msra.mxu0 0.0
    %624 = vmatprep.subr.mxu0 0.0
    %625 = vmatpush1.msra.mxu0 0.0
    %626 = vmatprep.subr.mxu0 0.0
    %627 = vmatpush1.msra.mxu0 0.0
    %628 = vmatprep.subr.mxu0 0.0
    %629 = vmatpush1.msra.mxu0 0.0
    %630 = vmatprep.subr.mxu0 0.0
    %631 = vmatpush1.msra.mxu0 0.0
    %632 = vmatprep.subr.mxu0 0.0
    %633 = vmatpush1.msra.mxu0 0.0
    %634 = vmatprep.subr.mxu0 0.0
    %635 = vmatpush1.msra.mxu0 0.0
    %636 = vmatprep.subr.mxu0 0.0
    %637 = vmatpush1.msra.mxu0 0.0
    %638 = vmatprep.subr.mxu0 0.0
    %639 = vmatpush1.msra.mxu0 0.0
    %640 = vmatprep.subr.mxu0 0.0
    %641 = vmatpush1.msra.mxu0 0.0
    %642 = vmatprep.subr.mxu0 0.0
    %643 = vmatpush1.msra.mxu0 0.0
    %644 = vmatprep.subr.mxu0 0.0
    %645 = vmatpush1.msra.mxu0 0.0
    %646 = vmatprep.subr.mxu0 0.0
    %647 = vmatpush1.msra.mxu0 0.0
    %648 = vmatprep.subr.mxu0 0.0
    %649 = vmatpush1.msra.mxu0 0.0
    %650 = vmatprep.subr.mxu0 0.0
    %651 = vmatpush1.msra.mxu0 0.0
    %652 = vmatprep.subr.mxu0 0.0
    %653 = vmatpush1.msra.mxu0 0.0
    %654 = vmatprep.subr.mxu0 0.0
    %655 = vmatpush1.msra.mxu0 0.0
    %656 = vmatprep.subr.mxu0 0.0
    %657 = vmatpush1.msra.mxu0 0.0
    %658 = vmatprep.subr.mxu0 0.0
    %659 = vmatpush1.msra.mxu0 0.0
    %660 = vmatprep.subr.mxu0 0.0
    %661 = vmatpush1.msra.mxu0 0.0
    %662 = vmatprep.subr.mxu0 0.0
    %663 = vmatpush1.msra.mxu0 0.0
    %664 = vmatprep.subr.mxu0 0.0
    %665 = vmatpush1.msra.mxu0 0.0
    %666 = vmatprep.subr.mxu0 0.0
    %667 = vmatpush1.msra.mxu0 0.0
    %668 = vmatprep.mubr.f32.mxu0 0.0
    %v669 = vand.u32 %v95, 4294901760
    %670 = vmatmul.mubr.f32.gmra.mrb[0].mxu0 %v669
    %v671 = vpop.f32.mrb[0].mxu0
    %v672 = vadd.f32 %v601, %v671
    %v673 = vpop.f32.mrb[0].mxu0
    %674 = vdwg.mxu0
    %675 = vmatprep.subr.mxu0 0.0
    %676 = vmatpush1.msra.mxu0 0.0
    %677 = vmatprep.subr.mxu0 0.0
    %678 = vmatpush1.msra.mxu0 0.0
    %679 = vmatprep.subr.mxu0 0.0
    %680 = vmatpush1.msra.mxu0 0.0
    %681 = vmatprep.subr.mxu0 0.0
    %682 = vmatpush1.msra.mxu0 0.0
    %683 = vmatprep.subr.mxu0 0.0
    %684 = vmatpush1.msra.mxu0 0.0
    %685 = vmatprep.subr.mxu0 0.0
    %686 = vmatpush1.msra.mxu0 0.0
    %687 = vmatprep.subr.mxu0 0.0
    %688 = vmatpush1.msra.mxu0 0.0
    %689 = vmatprep.subr.mxu0 0.0
    %690 = vmatpush1.msra.mxu0 0.0
    %691 = vmatprep.subr.mxu0 0.0
    %692 = vmatpush1.msra.mxu0 0.0
    %693 = vmatprep.subr.mxu0 0.0
    %694 = vmatpush1.msra.mxu0 0.0
    %695 = vmatprep.subr.mxu0 0.0
    %696 = vmatpush1.msra.mxu0 0.0
    %697 = vmatprep.subr.mxu0 0.0
    %698 = vmatpush1.msra.mxu0 0.0
    %699 = vmatprep.subr.mxu0 0.0
    %700 = vmatpush1.msra.mxu0 0.0
    %701 = vmatprep.subr.mxu0 0.0
    %702 = vmatpush1.msra.mxu0 0.0
    %703 = vmatprep.subr.mxu0 0.0
    %704 = vmatpush1.msra.mxu0 0.0
    %705 = vmatprep.subr.mxu0 0.0
    %706 = vmatpush1.msra.mxu0 0.0
    %707 = vmatprep.subr.mxu0 0.0
    %708 = vmatpush1.msra.mxu0 0.0
    %709 = vmatprep.subr.mxu0 0.0
    %710 = vmatpush1.msra.mxu0 0.0
    %711 = vmatprep.subr.mxu0 0.0
    %712 = vmatpush1.msra.mxu0 0.0
    %713 = vmatprep.subr.mxu0 0.0
    %714 = vmatpush1.msra.mxu0 0.0
    %715 = vmatprep.subr.mxu0 0.0
    %716 = vmatpush1.msra.mxu0 0.0
    %717 = vmatprep.subr.mxu0 0.0
    %718 = vmatpush1.msra.mxu0 0.0
    %719 = vmatprep.subr.mxu0 0.0
    %720 = vmatpush1.msra.mxu0 0.0
    %721 = vmatprep.subr.mxu0 0.0
    %722 = vmatpush1.msra.mxu0 0.0
    %723 = vmatprep.subr.mxu0 0.0
    %724 = vmatpush1.msra.mxu0 0.0
    %725 = vmatprep.subr.mxu0 0.0
    %726 = vmatpush1.msra.mxu0 0.0
    %727 = vmatprep.subr.mxu0 0.0
    %728 = vmatpush1.msra.mxu0 0.0
    %729 = vmatprep.subr.mxu0 0.0
    %730 = vmatpush1.msra.mxu0 0.0
    %731 = vmatprep.subr.mxu0 0.0
    %732 = vmatpush1.msra.mxu0 0.0
    %733 = vmatprep.subr.mxu0 0.0
    %734 = vmatpush1.msra.mxu0 0.0
    %735 = vmatprep.subr.mxu0 0.0
    %736 = vmatpush1.msra.mxu0 0.0
    %737 = vmatprep.subr.mxu0 0.0
    %738 = vmatpush1.msra.mxu0 0.0
    %739 = vmatprep.mubr.f32.mxu0 0.0
    %v740 = vand.u32 %v95, 4294901760
    %v741 = vsub.f32 %v95, %v740
    %742 = vmatmul.mubr.f32.gmra.mrb[0].mxu0 %v741
    %v743 = vpop.f32.mrb[0].mxu0
    %v744 = vadd.f32 %v672, %v743
    %v745 = vpop.f32.mrb[0].mxu0
    %746 = vdwg.mxu0
    %747 = vmatprep.subr.mxu0 0.0
    %748 = vmatpush1.msra.mxu0 1.0
    %749 = vmatprep.subr.mxu0 0.0
    %750 = vmatpush1.msra.mxu0 1.0
    %751 = vmatprep.subr.mxu0 0.0
    %752 = vmatpush1.msra.mxu0 1.0
    %753 = vmatprep.subr.mxu0 0.0
    %754 = vmatpush1.msra.mxu0 1.0
    %755 = vmatprep.subr.mxu0 0.0
    %756 = vmatpush1.msra.mxu0 1.0
    %757 = vmatprep.subr.mxu0 0.0
    %758 = vmatpush1.msra.mxu0 1.0
    %759 = vmatprep.subr.mxu0 0.0
    %760 = vmatpush1.msra.mxu0 1.0
    %761 = vmatprep.subr.mxu0 0.0
    %762 = vmatpush1.msra.mxu0 1.0
    %763 = vmatprep.subr.mxu0 0.0
    %764 = vmatpush1.msra.mxu0 1.0
    %765 = vmatprep.subr.mxu0 0.0
    %766 = vmatpush1.msra.mxu0 1.0
    %767 = vmatprep.subr.mxu0 0.0
    %768 = vmatpush1.msra.mxu0 1.0
    %769 = vmatprep.subr.mxu0 0.0
    %770 = vmatpush1.msra.mxu0 1.0
    %771 = vmatprep.subr.mxu0 0.0
    %772 = vmatpush1.msra.mxu0 1.0
    %773 = vmatprep.subr.mxu0 0.0
    %774 = vmatpush1.msra.mxu0 1.0
    %775 = vmatprep.subr.mxu0 0.0
    %776 = vmatpush1.msra.mxu0 1.0
    %777 = vmatprep.subr.mxu0 0.0
    %778 = vmatpush1.msra.mxu0 1.0
    %779 = vmatprep.subr.mxu0 0.0
    %780 = vmatpush1.msra.mxu0 0.0
    %781 = vmatprep.subr.mxu0 0.0
    %782 = vmatpush1.msra.mxu0 0.0
    %783 = vmatprep.subr.mxu0 0.0
    %784 = vmatpush1.msra.mxu0 0.0
    %785 = vmatprep.subr.mxu0 0.0
    %786 = vmatpush1.msra.mxu0 0.0
    %787 = vmatprep.subr.mxu0 0.0
    %788 = vmatpush1.msra.mxu0 0.0
    %789 = vmatprep.subr.mxu0 0.0
    %790 = vmatpush1.msra.mxu0 0.0
    %791 = vmatprep.subr.mxu0 0.0
    %792 = vmatpush1.msra.mxu0 0.0
    %793 = vmatprep.subr.mxu0 0.0
    %794 = vmatpush1.msra.mxu0 0.0
    %795 = vmatprep.subr.mxu0 0.0
    %796 = vmatpush1.msra.mxu0 0.0
    %797 = vmatprep.subr.mxu0 0.0
    %798 = vmatpush1.msra.mxu0 0.0
    %799 = vmatprep.subr.mxu0 0.0
    %800 = vmatpush1.msra.mxu0 0.0
    %801 = vmatprep.subr.mxu0 0.0
    %802 = vmatpush1.msra.mxu0 0.0
    %803 = vmatprep.subr.mxu0 0.0
    %804 = vmatpush1.msra.mxu0 0.0
    %805 = vmatprep.subr.mxu0 0.0
    %806 = vmatpush1.msra.mxu0 0.0
    %807 = vmatprep.subr.mxu0 0.0
    %808 = vmatpush1.msra.mxu0 0.0
    %809 = vmatprep.subr.mxu0 0.0
    %810 = vmatpush1.msra.mxu0 0.0
    %811 = vmatprep.mubr.f32.mxu0 0.0
    %v812 = vand.u32 %v95, 4294901760
    %v813 = vsub.f32 %v95, %v812
    %v814 = vand.u32 %v813, 4294901760
    %815 = vmatmul.mubr.f32.gmra.mrb[0].mxu0 %v814
    %v816 = vpop.f32.mrb[0].mxu0
    %v817 = vadd.f32 %v744, %v816
    %v818 = vpop.f32.mrb[0].mxu0
    %819 = vdwg.mxu0
    %820 = vmatprep.subr.mxu0 0.0
    %821 = vmatpush1.msra.mxu0 0.0
    %822 = vmatprep.subr.mxu0 0.0
    %823 = vmatpush1.msra.mxu0 0.0
    %824 = vmatprep.subr.mxu0 0.0
    %825 = vmatpush1.msra.mxu0 0.0
    %826 = vmatprep.subr.mxu0 0.0
    %827 = vmatpush1.msra.mxu0 0.0
    %828 = vmatprep.subr.mxu0 0.0
    %829 = vmatpush1.msra.mxu0 0.0
    %830 = vmatprep.subr.mxu0 0.0
    %831 = vmatpush1.msra.mxu0 0.0
    %832 = vmatprep.subr.mxu0 0.0
    %833 = vmatpush1.msra.mxu0 0.0
    %834 = vmatprep.subr.mxu0 0.0
    %835 = vmatpush1.msra.mxu0 0.0
    %836 = vmatprep.subr.mxu0 0.0
    %837 = vmatpush1.msra.mxu0 0.0
    %838 = vmatprep.subr.mxu0 0.0
    %839 = vmatpush1.msra.mxu0 0.0
    %840 = vmatprep.subr.mxu0 0.0
    %841 = vmatpush1.msra.mxu0 0.0
    %842 = vmatprep.subr.mxu0 0.0
    %843 = vmatpush1.msra.mxu0 0.0
    %844 = vmatprep.subr.mxu0 0.0
    %845 = vmatpush1.msra.mxu0 0.0
    %846 = vmatprep.subr.mxu0 0.0
    %847 = vmatpush1.msra.mxu0 0.0
    %848 = vmatprep.subr.mxu0 0.0
    %849 = vmatpush1.msra.mxu0 0.0
    %850 = vmatprep.subr.mxu0 0.0
    %851 = vmatpush1.msra.mxu0 0.0
    %852 = vmatprep.subr.mxu0 0.0
    %853 = vmatpush1.msra.mxu0 0.0
    %854 = vmatprep.subr.mxu0 0.0
    %855 = vmatpush1.msra.mxu0 0.0
    %856 = vmatprep.subr.mxu0 0.0
    %857 = vmatpush1.msra.mxu0 0.0
    %858 = vmatprep.subr.mxu0 0.0
    %859 = vmatpush1.msra.mxu0 0.0
    %860 = vmatprep.subr.mxu0 0.0
    %861 = vmatpush1.msra.mxu0 0.0
    %862 = vmatprep.subr.mxu0 0.0
    %863 = vmatpush1.msra.mxu0 0.0
    %864 = vmatprep.subr.mxu0 0.0
    %865 = vmatpush1.msra.mxu0 0.0
    %866 = vmatprep.subr.mxu0 0.0
    %867 = vmatpush1.msra.mxu0 0.0
    %868 = vmatprep.subr.mxu0 0.0
    %869 = vmatpush1.msra.mxu0 0.0
    %870 = vmatprep.subr.mxu0 0.0
    %871 = vmatpush1.msra.mxu0 0.0
    %872 = vmatprep.subr.mxu0 0.0
    %873 = vmatpush1.msra.mxu0 0.0
    %874 = vmatprep.subr.mxu0 0.0
    %875 = vmatpush1.msra.mxu0 0.0
    %876 = vmatprep.subr.mxu0 0.0
    %877 = vmatpush1.msra.mxu0 0.0
    %878 = vmatprep.subr.mxu0 0.0
    %879 = vmatpush1.msra.mxu0 0.0
    %880 = vmatprep.subr.mxu0 0.0
    %881 = vmatpush1.msra.mxu0 0.0
    %882 = vmatprep.subr.mxu0 0.0
    %883 = vmatpush1.msra.mxu0 0.0
    %884 = vmatprep.mubr.f32.mxu0 0.0
    %v885 = vand.u32 %v95, 4294901760
    %886 = vmatmul.mubr.f32.gmra.mrb[0].mxu0 %v885
    %v887 = vpop.f32.mrb[0].mxu0
    %v888 = vadd.f32 %v817, %v887
    %v889 = vpop.f32.mrb[0].mxu0
    %890 = vdwg.mxu0
    %891 = vmatprep.subr.mxu0 0.0
    %892 = vmatpush1.msra.mxu0 1.0
    %893 = vmatprep.subr.mxu0 0.0
    %894 = vmatpush1.msra.mxu0 1.0
    %895 = vmatprep.subr.mxu0 0.0
    %896 = vmatpush1.msra.mxu0 1.0
    %897 = vmatprep.subr.mxu0 0.0
    %898 = vmatpush1.msra.mxu0 1.0
    %899 = vmatprep.subr.mxu0 0.0
    %900 = vmatpush1.msra.mxu0 1.0
    %901 = vmatprep.subr.mxu0 0.0
    %902 = vmatpush1.msra.mxu0 1.0
    %903 = vmatprep.subr.mxu0 0.0
    %904 = vmatpush1.msra.mxu0 1.0
    %905 = vmatprep.subr.mxu0 0.0
    %906 = vmatpush1.msra.mxu0 1.0
    %907 = vmatprep.subr.mxu0 0.0
    %908 = vmatpush1.msra.mxu0 1.0
    %909 = vmatprep.subr.mxu0 0.0
    %910 = vmatpush1.msra.mxu0 1.0
    %911 = vmatprep.subr.mxu0 0.0
    %912 = vmatpush1.msra.mxu0 1.0
    %913 = vmatprep.subr.mxu0 0.0
    %914 = vmatpush1.msra.mxu0 1.0
    %915 = vmatprep.subr.mxu0 0.0
    %916 = vmatpush1.msra.mxu0 1.0
    %917 = vmatprep.subr.mxu0 0.0
    %918 = vmatpush1.msra.mxu0 1.0
    %919 = vmatprep.subr.mxu0 0.0
    %920 = vmatpush1.msra.mxu0 1.0
    %921 = vmatprep.subr.mxu0 0.0
    %922 = vmatpush1.msra.mxu0 1.0
    %923 = vmatprep.subr.mxu0 0.0
    %924 = vmatpush1.msra.mxu0 0.0
    %925 = vmatprep.subr.mxu0 0.0
    %926 = vmatpush1.msra.mxu0 0.0
    %927 = vmatprep.subr.mxu0 0.0
    %928 = vmatpush1.msra.mxu0 0.0
    %929 = vmatprep.subr.mxu0 0.0
    %930 = vmatpush1.msra.mxu0 0.0
    %931 = vmatprep.subr.mxu0 0.0
    %932 = vmatpush1.msra.mxu0 0.0
    %933 = vmatprep.subr.mxu0 0.0
    %934 = vmatpush1.msra.mxu0 0.0
    %935 = vmatprep.subr.mxu0 0.0
    %936 = vmatpush1.msra.mxu0 0.0
    %937 = vmatprep.subr.mxu0 0.0
    %938 = vmatpush1.msra.mxu0 0.0
    %939 = vmatprep.subr.mxu0 0.0
    %940 = vmatpush1.msra.mxu0 0.0
    %941 = vmatprep.subr.mxu0 0.0
    %942 = vmatpush1.msra.mxu0 0.0
    %943 = vmatprep.subr.mxu0 0.0
    %944 = vmatpush1.msra.mxu0 0.0
    %945 = vmatprep.subr.mxu0 0.0
    %946 = vmatpush1.msra.mxu0 0.0
    %947 = vmatprep.subr.mxu0 0.0
    %948 = vmatpush1.msra.mxu0 0.0
    %949 = vmatprep.subr.mxu0 0.0
    %950 = vmatpush1.msra.mxu0 0.0
    %951 = vmatprep.subr.mxu0 0.0
    %952 = vmatpush1.msra.mxu0 0.0
    %953 = vmatprep.subr.mxu0 0.0
    %954 = vmatpush1.msra.mxu0 0.0
    %955 = vmatprep.mubr.f32.mxu0 0.0
    %v956 = vand.u32 %v95, 4294901760
    %957 = vmatmul.mubr.f32.gmra.mrb[0].mxu0 %v956
    %v958 = vpop.f32.mrb[0].mxu0
    %v959 = vadd.f32 %v888, %v958
    %v960 = vpop.f32.mrb[0].mxu0
    %961 = vdwg.mxu0
    %v962 = vlog2.pop %v526
    %v963 = vmul.f32 %v962, 0.6931472
    %v964 = vadd.f32 %v963, %v82
    %v965 = vsub.f32 %v959, %v964
    %v966 = vsel %vm80, %v965, 0.0
    %v967 = vld [vmem:[#allocation2] sm:$0x1]
    %vm968 = vcmask 7168
    %v969 = vsel %vm968, %v966, 0.0
    %970 = vadd.xlane.f32.xlu0 %v969
    %v971 = vpop.xlane.xlu0 %970
    %v972 = vrot.slane %v971, 4
    %v973 = vadd.f32 %v971, %v972
    %v974 = vrot.slane %v973, 2
    %v975 = vadd.f32 %v973, %v974
    %v976 = vrot.slane %v975, 1
    %v977 = vadd.f32 %v975, %v976
    %s978 = vtos %v977
    %v979 = vstv %s978
    %v980 = vadd.f32 %v967, %v979
    %vm981 = vcmask 0
    %982 = vst.msk [vmem:[#allocation2] sm:$0x1] %vm981, %v980
    // Predicated region
    $region14: #{tpu_custom_call.1} parent=1 // pred_check
      _
    $region15: #{tpu_custom_call.1} parent=1 // pred_check_branch
      %984 = sbr.rel (0) target = $region17
    $region16: #{tpu_custom_call.1} parent=1 // pred_region
      %s986 = ssub.s32 16, 16
      %987 = vsyncadd [#allocation3], %s986
      %s989 = sshll.u32 [#allocation2], 4
      %s990 = int_to_ptr.vmem [resolvable:$true] %s989
      %992 = dma.vmem_to_hbm [thread:$0]  %s990, 16, %s2, [#allocation3]
    $region17: #{tpu_custom_call.1} parent=1 // pred_fallthru
      _
    // Predicated region
    $region18: #{tpu_custom_call.1} parent=1 // pred_check
      _
    $region19: #{tpu_custom_call.1} parent=1 // pred_check_branch
      %994 = sbr.rel (0) target = $region21
    $region20: #{tpu_custom_call.1} parent=1 // pred_region
      %995 = dma.done [#allocation3], 16
    $region21: #{tpu_custom_call.1} parent=1 // pred_fallthru
      _
    %996 = vsyncpa [#allocation3], 1

// kernel: tpu_custom_call.1
$region0: #{tpu_custom_call.1}
  #allocation0 [shape = 'u32[]', space=smem, size = 0x4, offset = 0x4, fixed_abs, tag = 'smem constant byte address 0x4 - core index']
  #allocation1 [shape = 'u32[144,128]{1,0:T(1,128)}', space=vmem, size = 0x12000, scoped, tag = 'internal scratch']
  %s0 = inlined_call_operand.vmem [shape: f32[8,128], index: 0, kind: input, shape index: {}]
  %s1 = inlined_call_operand.vmem [shape: s32[8,1], index: 1, kind: input, shape index: {}]
  %s2 = inlined_call_operand.hbm [shape: f32[1,1,1], index: 2, kind: output, shape index: {}]
  %s3 = sld [smem:[#allocation0]]
  $region22: #{tpu_custom_call.1} parent=0
    _
  %s5 = ssub.s32 1, %s3
  %s6 = scalar_select 0, %s5, %s3
  $region1: #{tpu_custom_call.1} parent=0
    #allocation2 [shape = 'u8[512]{0}', space=vmem, size = 0x400, scoped, tag = 'output window, operand 0, single buffered']
    #allocation3 [shape = 's32[1]{0}', space=sflag, size = 0x4, scoped, tag = 'scoped memory for tpu_custom_call.1']
    %7 = vsyncpa [#allocation3], 0
    // Predicated region
    $region2: #{tpu_custom_call.1} parent=1 // pred_check
      _
    $region3: #{tpu_custom_call.1} parent=1 // pred_check_branch
      %9 = sbr.rel (0) target = $region5
    $region4: #{tpu_custom_call.1} parent=1 // pred_region
      %s10 = sadd.s32 0, 0
      %p11 = scmp.lt.s32.totalorder %s10, 0
      %s12 = scalar_select %p11, %s10, 0
      %p13 = scmp.lt.s32.totalorder %s12, 0
      %s14 = scalar_select %p13, %s12, 0
      %s15 = smul.addr %s14, 8
      %s16 = scalar_lea.vmem %s0, %s15
      %s17 = sadd.s32 0, 0
      %p18 = scmp.lt.s32.totalorder %s17, 0
      %s19 = scalar_select %p18, %s17, 0
    $region5: #{tpu_custom_call.1} parent=1 // pred_fallthru
      _
    // Predicated region
    $region6: #{tpu_custom_call.1} parent=1 // pred_check
      _
    $region7: #{tpu_custom_call.1} parent=1 // pred_check_branch
      %21 = sbr.rel (0) target = $region9
    $region8: #{tpu_custom_call.1} parent=1 // pred_region
      %s22 = sadd.s32 0, 0
      %p23 = scmp.lt.s32.totalorder %s22, 0
      %s24 = scalar_select %p23, %s22, 0
      %p25 = scmp.lt.s32.totalorder %s24, 0
      %s26 = scalar_select %p25, %s24, 0
      %s27 = smul.addr %s26, 8
      %s28 = scalar_lea.vmem %s1, %s27
      %s29 = sadd.s32 0, 0
      %p30 = scmp.lt.s32.totalorder %s29, 0
      %s31 = scalar_select %p30, %s29, 0
    $region9: #{tpu_custom_call.1} parent=1 // pred_fallthru
      _
    %s32 = sadd.s32 0, 0
    %p33 = scmp.lt.s32.totalorder %s32, 0
    %s34 = scalar_select %p33, %s32, 0
    %p35 = scmp.lt.s32.totalorder %s34, 0
    %s36 = scalar_select %p35, %s34, 0
    %s37 = smul.addr %s36, 8
    %s38 = scalar_lea.vmem %s0, %s37
    %s39 = sadd.s32 0, 0
    %p40 = scmp.lt.s32.totalorder %s39, 0
    %s41 = scalar_select %p40, %s39, 0
    %p42 = scmp.lt.s32.totalorder %s41, 0
    %s43 = scalar_select %p42, %s41, 0
    %s44 = smul.addr %s43, 8
    %s45 = scalar_lea.vmem %s1, %s44
    %s46 = sadd.s32 0, 0
    %p47 = scmp.lt.s32.totalorder %s46, 0
    %s48 = scalar_select %p47, %s46, 0
    %p49 = scmp.lt.s32.totalorder %s48, 0
    %s50 = scalar_select %p49, %s48, 0
    %s51 = smul.addr %s50, 8
    %s52 = scalar_lea.vmem %s0, %s51
    %s53 = sadd.s32 0, 0
    %p54 = scmp.lt.s32.totalorder %s53, 0
    %s55 = scalar_select %p54, %s53, 0
    %s56 = sadd.s32 0, 0
    %p57 = scmp.lt.s32.totalorder %s56, 0
    %s58 = scalar_select %p57, %s56, 0
    %p59 = scmp.lt.s32.totalorder %s58, 0
    %s60 = scalar_select %p59, %s58, 0
    %s61 = smul.addr %s60, 8
    %s62 = scalar_lea.vmem %s1, %s61
    %s63 = sadd.s32 0, 0
    %p64 = scmp.lt.s32.totalorder %s63, 0
    %s65 = scalar_select %p64, %s63, 0
    %p66 = scmp.eq.s32.totalorder 0, 0
    // Predicated region
    $region10: #{tpu_custom_call.1} parent=1 // pred_check
      %p67 = pneg %p66
    $region11: #{tpu_custom_call.1} parent=1 // pred_check_branch
      %69 = sbr.rel (%p67) target = $region13
    $region12: #{tpu_custom_call.1} parent=1 // pred_region
      %vm70 = vcmask 0
      %71 = vst.msk [vmem:[#allocation2] sm:$0x1] %vm70, 0.0
    $region13: #{tpu_custom_call.1} parent=1 // pred_fallthru
      _
    %v72 = vld [vmem:[%s52] sm:$0xff]
    %v73 = vld [vmem:[%s62] sm:$0xff]
    %s74 = sadd.s32 0, 0
    %s75 = smul.u32 %s74, 8
    %v76 = vlaneseq
    %v77 = vshrl.u32 %v76, 7
    %v78 = vstv %s75
    %v79 = vadd.s32 %v77, %v78
    %vm80 = vcmp.lt.s32.totalorder %v79, 8
    %81 = vmax.xlane.f32.xlu0 %v72
    %v82 = vpop.xlane.xlu0 %81
    %v83 = vsub.f32 %v72, %v82
    %v84 = vmul.f32 %v83, 1.442695
    %v85 = vpow.pop %v84
    %v86 = vlaneseq
    %v87 = vand.u32 %v86, 127
    %88 = vset.pattern.permute.xlu0 0
    %89 = vperm.xlu0 %88, %v73
    %v90 = vpop.permute.xlu0 %89
    %vm91 = vcmp.eq.s32.totalorder %v87, %v90
    %v92 = vsel %vm80, 1, 0
    %vm93 = vcmp.eq.s32.totalorder %v92, 1
    %vm94 = vmand %vm91, %vm93
    %v95 = vsel %vm94, %v72, 0.0
    %96 = vadd.xlane.f32.xlu0 %v85
    %v97 = vpop.xlane.xlu0 %96
    %98 = vadd.xlane.f32.xlu0 %v95
    %v99 = vpop.xlane.xlu0 %98
    %v100 = vlog2.pop %v97
    %v101 = vmul.f32 %v100, 0.6931472
    %v102 = vadd.f32 %v101, %v82
    %v103 = vsub.f32 %v99, %v102
    %v104 = vsel %vm80, %v103, 0.0
    %v105 = vld [vmem:[#allocation2] sm:$0x1]
    %vm106 = vcmask 7168
    %v107 = vsel %vm106, %v104, 0.0
    %108 = vadd.xlane.f32.xlu0 %v107
    %v109 = vpop.xlane.xlu0 %108
    %v110 = vrot.slane %v109, 4
    %v111 = vadd.f32 %v109, %v110
    %v112 = vrot.slane %v111, 2
    %v113 = vadd.f32 %v111, %v112
    %v114 = vrot.slane %v113, 1
    %v115 = vadd.f32 %v113, %v114
    %s116 = vtos %v115
    %v117 = vstv %s116
    %v118 = vadd.f32 %v105, %v117
    %vm119 = vcmask 0
    %120 = vst.msk [vmem:[#allocation2] sm:$0x1] %vm119, %v118
    // Predicated region
    $region14: #{tpu_custom_call.1} parent=1 // pred_check
      _
    $region15: #{tpu_custom_call.1} parent=1 // pred_check_branch
      %122 = sbr.rel (0) target = $region17
    $region16: #{tpu_custom_call.1} parent=1 // pred_region
      %s124 = ssub.s32 16, 16
      %125 = vsyncadd [#allocation3], %s124
      %s127 = sshll.u32 [#allocation2], 4
      %s128 = int_to_ptr.vmem [resolvable:$true] %s127
      %130 = dma.vmem_to_hbm [thread:$0]  %s128, 16, %s2, [#allocation3]
    $region17: #{tpu_custom_call.1} parent=1 // pred_fallthru
      _
    // Predicated region
    $region18: #{tpu_custom_call.1} parent=1 // pred_check
      _
    $region19: #{tpu_custom_call.1} parent=1 // pred_check_branch
      %132 = sbr.rel (0) target = $region21
    $region20: #{tpu_custom_call.1} parent=1 // pred_region
      %133 = dma.done [#allocation3], 16
    $region21: #{tpu_custom_call.1} parent=1 // pred_fallthru
      _
    %134 = vsyncpa [#allocation3], 1

</llo_original>
